<compile_context>
chip_gen: v5e
topology: v5e:2x2
jax: 0.10.0
libtpu: 0.0.40
codegen_flags: <defaults>
</compile_context>

<pallas_src>
import functools

import jax
import jax.numpy as jnp
from jax import lax
from jax.experimental import pallas as pl
from jax.experimental.pallas import tpu as pltpu

_DEFAULT_PHYS_VMEM_BYTES = 64 * 1024 * 1024  # assume the smallest (v7x per-TC)


def _round_up(x, m):
    return -(-x // m) * m


def _vmem_limit_bytes():
    """Generation-aware scoped-VMEM limit with headroom."""
    phys = _DEFAULT_PHYS_VMEM_BYTES
    try:
        info_fn = getattr(pltpu, "get_tpu_info", None)
        if info_fn is not None:
            cap = getattr(info_fn(), "vmem_capacity_bytes", None)
            if cap:
                phys = int(cap)
    except Exception:
        pass
    # 3/4 of physical, capped at 96 MiB: v5e/v6e (128 MiB) -> 96 MiB,
    # v7x (64 MiB per TC) -> 48 MiB.
    return min((phys * 3) // 4, 96 * 1024 * 1024)


def _per_entry_vmem_bytes(k, d, itemsize, buffers=2):
    """Padded VMEM bytes per batch entry (inputs + in-kernel f32 working set)."""
    itemsize = int(itemsize)
    sub_in = max(8, 32 // itemsize)          # sublane packing: 8 f32, 16 bf16, 32 int8
    k_in = _round_up(k, sub_in)
    k_f32 = _round_up(k, 8)
    d_pad = _round_up(d, 128)
    lanes = 128
    in_blocks = 3 * buffers * k_in * d_pad * itemsize   # pipelined (bt,k,d) input buffers
    upcast = 3 * k_f32 * d_pad * 4                      # f32 working copies of a/p/n
    temps = 10 * _round_up(k, lanes) * 4                # live (bt,k) f32 intermediates
    out_blocks = buffers * lanes * 4                    # (bt,1) output padded to 128 lanes
    return in_blocks + upcast + temps + out_blocks


def _choose_tiling(b, k, d, itemsize, budget_bytes):
    """Pick (batch_tile, num_tiles) under the VMEM budget, >=2 even grid steps."""
    per_entry = _per_entry_vmem_bytes(k, d, itemsize)
    max_entries = max(8, budget_bytes // per_entry)
    num_tiles = -(-b // max_entries)
    if b >= 16:
        # v7x has 2 TensorCores: keep >=2 grid steps (even count for balance)
        # so the "parallel" axis can shard and DMA overlaps compute.
        num_tiles = max(num_tiles, 2)
        if num_tiles % 2:
            num_tiles += 1
    if num_tiles <= 1:
        return b, 1                          # block == full array dims (no (8,128) issue)
    bt = _round_up(-(-b // num_tiles), 8)    # multiple of 8 for the (bt,1) output sublanes
    num_tiles = -(-b // bt)
    return bt, num_tiles


def _msl_apn_kernel(a_ref, p_ref, n_ref, loss_ref, *,
                    thresh, margin, scale_pos, scale_neg, batch_size):
    # Blocks are (bt, k, d); upcast to f32 (inputs may be bf16).
    a = a_ref[...].astype(jnp.float32)
    p = p_ref[...].astype(jnp.float32)
    n = n_ref[...].astype(jnp.float32)
    bt = a_ref.shape[0]

    eps = 1e-8

    # Row-wise dot products / squared norms over the feature dim -> (bt, k).
    dot_ap = jnp.sum(a * p, axis=-1)
    dot_an = jnp.sum(a * n, axis=-1)
    ssa = jnp.sum(a * a, axis=-1)
    ssp = jnp.sum(p * p, axis=-1)
    ssn = jnp.sum(n * n, axis=-1)

    # cos = dot / max(||a||*||x||, eps), via a single rsqrt (EUP slot) instead
    # of sqrt + divide on the VALU path.
    pos_sim = dot_ap * lax.rsqrt(jnp.maximum(ssa * ssp, eps * eps))  # (bt, k)
    neg_sim = dot_an * lax.rsqrt(jnp.maximum(ssa * ssn, eps * eps))  # (bt, k)

    # Filter negatives: keep neg_sim where neg_sim + margin > min(pos_sim).
    min_pos = jnp.min(pos_sim, axis=-1, keepdims=True)               # (bt, 1)
    keep = (neg_sim + margin) > min_pos                              # (bt, k)
    num_neg = jnp.sum(keep.astype(jnp.float32), axis=-1, keepdims=True)

    pos_loss = (1.0 / scale_pos) * jnp.log(
        1.0 + jnp.sum(jnp.exp(-scale_pos * (pos_sim - thresh)),
                      axis=-1, keepdims=True))
    neg_terms = jnp.where(keep, jnp.exp(scale_neg * (neg_sim - thresh)), 0.0)
    neg_loss = (1.0 / scale_neg) * jnp.log(
        1.0 + jnp.sum(neg_terms, axis=-1, keepdims=True))

    # Entry contributes only if at least one negative survived (mirrors the
    # PyTorch `continue`) AND the row is a real (non-tail-padding) batch entry.
    row = pl.program_id(0) * bt + lax.broadcasted_iota(jnp.int32, (bt, 1), 0)
    valid = (num_neg > 0.0) & (row < batch_size)                     # (bt, 1)
    # Single merged output: invalid rows write exactly 0; pos_loss is strictly
    # positive for valid rows, so the wrapper recovers `valid` as loss > 0.
    loss_ref[...] = jnp.where(valid, pos_loss + neg_loss, 0.0)


def multi_similarity_loss_apn(a_feat, p_feat, n_feat, *,
                              thresh=0.5, margin=0.3,
                              scale_pos=2.0, scale_neg=40.0,
                              batch_tile=None):
    """a/p/n: (b, k, d) or (k, d), f32 or bf16. Returns scalar f32 loss."""
    if a_feat.ndim == 2:
        a_feat = a_feat[None]
        p_feat = p_feat[None]
        n_feat = n_feat[None]
    b, k, d = a_feat.shape
    itemsize = jnp.dtype(a_feat.dtype).itemsize

    vmem_limit = _vmem_limit_bytes()
    if batch_tile is not None:
        bt = int(batch_tile)
        bt = b if bt >= b else _round_up(bt, 8)
        num_tiles = -(-b // bt)
    else:
        bt, num_tiles = _choose_tiling(b, k, d, itemsize, (vmem_limit * 2) // 3)

    kernel = functools.partial(
        _msl_apn_kernel,
        thresh=float(thresh), margin=float(margin),
        scale_pos=float(scale_pos), scale_neg=float(scale_neg),
        batch_size=b)

    in_spec = pl.BlockSpec((bt, k, d), lambda i: (i, 0, 0))
    out_spec = pl.BlockSpec((bt, 1), lambda i: (i, 0))

    cost = pl.CostEstimate(
        flops=b * k * (10 * d + 32),
        transcendentals=4 * b * k,
        bytes_accessed=3 * b * k * d * itemsize + b * 4)

    loss_b = pl.pallas_call(
        kernel,
        out_shape=jax.ShapeDtypeStruct((b, 1), jnp.float32),
        grid_spec=pltpu.PrefetchScalarGridSpec(
            num_scalar_prefetch=0,
            grid=(num_tiles,),
            in_specs=[in_spec, in_spec, in_spec],
            out_specs=out_spec),
        compiler_params=pltpu.CompilerParams(
            dimension_semantics=("parallel",),
            vmem_limit_bytes=vmem_limit),
        cost_estimate=cost,
    )(a_feat, p_feat, n_feat)

    # Final masked mean over valid entries (loss > 0 <=> entry not skipped).
    loss = loss_b[:, 0]
    total = jnp.sum(loss)
    count = jnp.sum((loss > 0.0).astype(jnp.float32))
    return jnp.where(count > 0.0, total / jnp.maximum(count, 1.0),
                     jnp.zeros((), jnp.float32))


if __name__ == "__main__":
    # Small deterministic inputs consistent with the module's (b, k, d) contract.
    b, k, d = 2, 8, 32
    key = jax.random.PRNGKey(0)
    ka, kp, kn = jax.random.split(key, 3)
    a = jax.random.normal(ka, (b, k, d), dtype=jnp.float32)
    p = jax.random.normal(kp, (b, k, d), dtype=jnp.float32)
    n = jax.random.normal(kn, (b, k, d), dtype=jnp.float32)

    loss = multi_similarity_loss_apn(a, p, n,
                                     thresh=0.5, margin=0.3,
                                     scale_pos=2.0, scale_neg=40.0)
    jax.block_until_ready(loss)
    assert bool(jnp.isfinite(loss)), "loss is not finite"

    # Multi-tile + uneven-tail-masking + bf16 upcast path.
    b2 = 20
    ka2, kp2, kn2 = jax.random.split(jax.random.PRNGKey(1), 3)
    a2 = jax.random.normal(ka2, (b2, k, d), dtype=jnp.float32).astype(jnp.bfloat16)
    p2 = jax.random.normal(kp2, (b2, k, d), dtype=jnp.float32).astype(jnp.bfloat16)
    n2 = jax.random.normal(kn2, (b2, k, d), dtype=jnp.float32).astype(jnp.bfloat16)
    loss2 = multi_similarity_loss_apn(a2, p2, n2, batch_tile=8)
    jax.block_until_ready(loss2)
    assert bool(jnp.isfinite(loss2)), "loss2 is not finite"

    print("KERNEL_OK")
</pallas_src>

<mosaic_0001>
module attributes {stable_mosaic.version = 11 : i64} {
  func.func @_msl_apn_kernel(%arg0: i32, %arg1: memref<2x8x32xf32, #tpu.memory_space<vmem>>, %arg2: memref<2x8x32xf32, #tpu.memory_space<vmem>>, %arg3: memref<2x8x32xf32, #tpu.memory_space<vmem>>, %arg4: memref<2x1xf32, #tpu.memory_space<vmem>>) attributes {dimension_semantics = [#tpu.dimension_semantics<parallel>], iteration_bounds = array<i64: 1>, scalar_prefetch = 0 : i64, scratch_operands = 0 : i64, tpu.core_type = #tpu.core_type<tc>, window_params = [{transform_indices = @transform_0, window_bounds = array<i64: 2, 8, 32>}, {transform_indices = @transform_1, window_bounds = array<i64: 2, 8, 32>}, {transform_indices = @transform_2, window_bounds = array<i64: 2, 8, 32>}, {transform_indices = @transform_3, window_bounds = array<i64: 2, 1>}]} {
    %c0 = arith.constant 0 : index
    %c0_0 = arith.constant 0 : index
    %c0_1 = arith.constant 0 : index
    %0 = vector.load %arg1[%c0, %c0_0, %c0_1] : memref<2x8x32xf32, #tpu.memory_space<vmem>>, vector<2x8x32xf32>
    %c0_2 = arith.constant 0 : index
    %c0_3 = arith.constant 0 : index
    %c0_4 = arith.constant 0 : index
    %1 = vector.load %arg2[%c0_2, %c0_3, %c0_4] : memref<2x8x32xf32, #tpu.memory_space<vmem>>, vector<2x8x32xf32>
    %c0_5 = arith.constant 0 : index
    %c0_6 = arith.constant 0 : index
    %c0_7 = arith.constant 0 : index
    %2 = vector.load %arg3[%c0_5, %c0_6, %c0_7] : memref<2x8x32xf32, #tpu.memory_space<vmem>>, vector<2x8x32xf32>
    %3 = arith.mulf %0, %1 : vector<2x8x32xf32>
    %cst = arith.constant dense<0.000000e+00> : vector<2x8xf32>
    %4 = vector.multi_reduction <add>, %3, %cst [2] : vector<2x8x32xf32> to vector<2x8xf32>
    %5 = arith.mulf %0, %2 : vector<2x8x32xf32>
    %cst_8 = arith.constant dense<0.000000e+00> : vector<2x8xf32>
    %6 = vector.multi_reduction <add>, %5, %cst_8 [2] : vector<2x8x32xf32> to vector<2x8xf32>
    %7 = arith.mulf %0, %0 : vector<2x8x32xf32>
    %cst_9 = arith.constant dense<0.000000e+00> : vector<2x8xf32>
    %8 = vector.multi_reduction <add>, %7, %cst_9 [2] : vector<2x8x32xf32> to vector<2x8xf32>
    %9 = arith.mulf %1, %1 : vector<2x8x32xf32>
    %cst_10 = arith.constant dense<0.000000e+00> : vector<2x8xf32>
    %10 = vector.multi_reduction <add>, %9, %cst_10 [2] : vector<2x8x32xf32> to vector<2x8xf32>
    %11 = arith.mulf %2, %2 : vector<2x8x32xf32>
    %cst_11 = arith.constant dense<0.000000e+00> : vector<2x8xf32>
    %12 = vector.multi_reduction <add>, %11, %cst_11 [2] : vector<2x8x32xf32> to vector<2x8xf32>
    %13 = arith.mulf %8, %10 : vector<2x8xf32>
    %cst_12 = arith.constant 1.000000e-16 : f32
    %14 = vector.broadcast %cst_12 : f32 to vector<2x8xf32>
    %15 = arith.maximumf %13, %14 : vector<2x8xf32>
    %16 = math.rsqrt %15 : vector<2x8xf32>
    %17 = arith.mulf %4, %16 : vector<2x8xf32>
    %18 = arith.mulf %8, %12 : vector<2x8xf32>
    %cst_13 = arith.constant 1.000000e-16 : f32
    %19 = vector.broadcast %cst_13 : f32 to vector<2x8xf32>
    %20 = arith.maximumf %18, %19 : vector<2x8xf32>
    %21 = math.rsqrt %20 : vector<2x8xf32>
    %22 = arith.mulf %6, %21 : vector<2x8xf32>
    %cst_14 = arith.constant dense<0x7F800000> : vector<2xf32>
    %23 = vector.multi_reduction <minimumf>, %17, %cst_14 [1] : vector<2x8xf32> to vector<2xf32>
    %24 = vector.shape_cast %23 : vector<2xf32> to vector<2x1xf32>
    %cst_15 = arith.constant 3.000000e-01 : f32
    %25 = vector.broadcast %cst_15 : f32 to vector<2x8xf32>
    %26 = arith.addf %22, %25 : vector<2x8xf32>
    %27 = vector.broadcast %24 : vector<2x1xf32> to vector<2x8xf32>
    %28 = arith.cmpf ogt, %26, %27 : vector<2x8xf32>
    %29 = arith.extui %28 : vector<2x8xi1> to vector<2x8xi32>
    %30 = arith.sitofp %29 : vector<2x8xi32> to vector<2x8xf32>
    %cst_16 = arith.constant dense<0.000000e+00> : vector<2xf32>
    %31 = vector.multi_reduction <add>, %30, %cst_16 [1] : vector<2x8xf32> to vector<2xf32>
    %32 = vector.shape_cast %31 : vector<2xf32> to vector<2x1xf32>
    %cst_17 = arith.constant 5.000000e-01 : f32
    %33 = vector.broadcast %cst_17 : f32 to vector<2x8xf32>
    %34 = arith.subf %17, %33 : vector<2x8xf32>
    %cst_18 = arith.constant -2.000000e+00 : f32
    %35 = vector.broadcast %cst_18 : f32 to vector<2x8xf32>
    %36 = arith.mulf %35, %34 : vector<2x8xf32>
    %37 = math.exp %36 : vector<2x8xf32>
    %cst_19 = arith.constant dense<0.000000e+00> : vector<2xf32>
    %38 = vector.multi_reduction <add>, %37, %cst_19 [1] : vector<2x8xf32> to vector<2xf32>
    %39 = vector.shape_cast %38 : vector<2xf32> to vector<2x1xf32>
    %cst_20 = arith.constant 1.000000e+00 : f32
    %40 = vector.broadcast %cst_20 : f32 to vector<2x1xf32>
    %41 = arith.addf %40, %39 : vector<2x1xf32>
    %42 = math.log %41 : vector<2x1xf32>
    %cst_21 = arith.constant 5.000000e-01 : f32
    %43 = vector.broadcast %cst_21 : f32 to vector<2x1xf32>
    %44 = arith.mulf %43, %42 : vector<2x1xf32>
    %cst_22 = arith.constant 5.000000e-01 : f32
    %45 = vector.broadcast %cst_22 : f32 to vector<2x8xf32>
    %46 = arith.subf %22, %45 : vector<2x8xf32>
    %cst_23 = arith.constant 4.000000e+01 : f32
    %47 = vector.broadcast %cst_23 : f32 to vector<2x8xf32>
    %48 = arith.mulf %47, %46 : vector<2x8xf32>
    %49 = math.exp %48 : vector<2x8xf32>
    %cst_24 = arith.constant 0.000000e+00 : f32
    %50 = vector.broadcast %cst_24 : f32 to vector<2x8xf32>
    %51 = arith.select %28, %49, %50 : vector<2x8xi1>, vector<2x8xf32>
    %cst_25 = arith.constant dense<0.000000e+00> : vector<2xf32>
    %52 = vector.multi_reduction <add>, %51, %cst_25 [1] : vector<2x8xf32> to vector<2xf32>
    %53 = vector.shape_cast %52 : vector<2xf32> to vector<2x1xf32>
    %cst_26 = arith.constant 1.000000e+00 : f32
    %54 = vector.broadcast %cst_26 : f32 to vector<2x1xf32>
    %55 = arith.addf %54, %53 : vector<2x1xf32>
    %56 = math.log %55 : vector<2x1xf32>
    %cst_27 = arith.constant 2.500000e-02 : f32
    %57 = vector.broadcast %cst_27 : f32 to vector<2x1xf32>
    %58 = arith.mulf %57, %56 : vector<2x1xf32>
    %c2_i32 = arith.constant 2 : i32
    %59 = arith.muli %arg0, %c2_i32 : i32
    %60 = tpu.iota {dimensions = array<i32: 0>} : vector<2x1xi32>
    %61 = vector.broadcast %59 : i32 to vector<2x1xi32>
    %62 = arith.addi %61, %60 : vector<2x1xi32>
    %cst_28 = arith.constant 0.000000e+00 : f32
    %63 = vector.broadcast %cst_28 : f32 to vector<2x1xf32>
    %64 = arith.cmpf ogt, %32, %63 : vector<2x1xf32>
    %c2_i32_29 = arith.constant 2 : i32
    %65 = vector.broadcast %c2_i32_29 : i32 to vector<2x1xi32>
    %66 = arith.cmpi slt, %62, %65 : vector<2x1xi32>
    %67 = arith.andi %64, %66 : vector<2x1xi1>
    %68 = arith.addf %44, %58 : vector<2x1xf32>
    %cst_30 = arith.constant 0.000000e+00 : f32
    %69 = vector.broadcast %cst_30 : f32 to vector<2x1xf32>
    %70 = arith.select %67, %68, %69 : vector<2x1xi1>, vector<2x1xf32>
    %c0_31 = arith.constant 0 : index
    %c0_32 = arith.constant 0 : index
    %71 = vector.load %arg4[%c0_31, %c0_32] : memref<2x1xf32, #tpu.memory_space<vmem>>, vector<2x1xf32>
    tpu.vector_store %arg4[%c0_31, %c0_32], %70 {strides = array<i32>} : memref<2x1xf32, #tpu.memory_space<vmem>>, vector<2x1xf32>,
    return
  }
  func.func @transform_0(%arg0: i32) -> (i32, i32, i32) {
    %c0_i32 = arith.constant 0 : i32
    %c0_i32_0 = arith.constant 0 : i32
    %c0_i32_1 = arith.constant 0 : i32
    return %arg0, %c0_i32, %c0_i32_0 : i32, i32, i32
  }
  func.func @transform_1(%arg0: i32) -> (i32, i32, i32) {
    %c0_i32 = arith.constant 0 : i32
    %c0_i32_0 = arith.constant 0 : i32
    %c0_i32_1 = arith.constant 0 : i32
    return %arg0, %c0_i32, %c0_i32_0 : i32, i32, i32
  }
  func.func @transform_2(%arg0: i32) -> (i32, i32, i32) {
    %c0_i32 = arith.constant 0 : i32
    %c0_i32_0 = arith.constant 0 : i32
    %c0_i32_1 = arith.constant 0 : i32
    return %arg0, %c0_i32, %c0_i32_0 : i32, i32, i32
  }
  func.func @transform_3(%arg0: i32) -> (i32, i32) {
    %c0_i32 = arith.constant 0 : i32
    %c0_i32_0 = arith.constant 0 : i32
    return %arg0, %c0_i32 : i32, i32
  }
}

</mosaic_0001>

<llo_original>
// kernel: tpu_custom_call.1
$region0: #{tpu_custom_call.1}
  #allocation0 [shape = 'u32[]', space=smem, size = 0x4, offset = 0x4, fixed_abs, tag = 'smem constant byte address 0x4 - core index']
  #allocation1 [shape = 'u32[72,128]{1,0:T(1,128)}', space=vmem, size = 0x9000, scoped, tag = 'internal scratch']
  %s0 = inlined_call_operand.hbm [shape: f32[2,8,32], index: 0, kind: input, shape index: {}]
  %s1 = inlined_call_operand.hbm [shape: f32[2,8,32], index: 1, kind: input, shape index: {}]
  %s2 = inlined_call_operand.hbm [shape: f32[2,8,32], index: 2, kind: input, shape index: {}]
  %s3 = inlined_call_operand.vmem [shape: f32[2,1], index: 3, kind: output, shape index: {}]
  %s4 = sld [smem:[#allocation0]]
  $region34: #{tpu_custom_call.1} parent=0
    _
  %s6 = ssub.s32 1, %s4
  %s7 = scalar_select 0, %s6, %s4
  $region1: #{tpu_custom_call.1} parent=0
    #allocation2 [shape = 'u8[8192]{0}', space=vmem, size = 0x2000, scoped, tag = 'input window, operand 0, single buffered']
    #allocation3 [shape = 's32[1]{0}', space=sflag, size = 0x4, scoped, tag = 'scoped memory for tpu_custom_call.1']
    #allocation4 [shape = 'u8[8192]{0}', space=vmem, size = 0x2000, scoped, tag = 'input window, operand 1, single buffered']
    #allocation5 [shape = 's32[1]{0}', space=sflag, size = 0x4, scoped, tag = 'scoped memory for tpu_custom_call.1']
    #allocation6 [shape = 'u8[8192]{0}', space=vmem, size = 0x2000, scoped, tag = 'input window, operand 2, single buffered']
    %8 = vsyncpa [#allocation3], 0
    %9 = vsyncpa [#allocation5], 0
    // Predicated region
    $region2: #{tpu_custom_call.1} parent=1 // pred_check
      _
    $region3: #{tpu_custom_call.1} parent=1 // pred_check_branch
      %11 = sbr.rel (0) target = $region5
    $region4: #{tpu_custom_call.1} parent=1 // pred_region
      %13 = vsyncadd [#allocation3], 0
      %s14 = sshll.u32 %s0, 4
      %s15 = int_to_ptr.hbm [resolvable:$true] %s14
      %s16 = sshll.u32 [#allocation2], 4
      %s17 = int_to_ptr.vmem [resolvable:$true] %s16
      %22 = dma.hbm_to_vmem [thread:$0]  %s15, 256, %s17, [#allocation3], 128, 128, 8
    $region5: #{tpu_custom_call.1} parent=1 // pred_fallthru
      _
    // Predicated region
    $region6: #{tpu_custom_call.1} parent=1 // pred_check
      _
    $region7: #{tpu_custom_call.1} parent=1 // pred_check_branch
      %24 = sbr.rel (0) target = $region9
    $region8: #{tpu_custom_call.1} parent=1 // pred_region
      %26 = vsyncadd [#allocation5], 0
      %s27 = sshll.u32 %s1, 4
      %s28 = int_to_ptr.hbm [resolvable:$true] %s27
      %s29 = sshll.u32 [#allocation4], 4
      %s30 = int_to_ptr.vmem [resolvable:$true] %s29
      %35 = dma.hbm_to_vmem [thread:$0]  %s28, 256, %s30, [#allocation5], 128, 128, 8
    $region9: #{tpu_custom_call.1} parent=1 // pred_fallthru
      _
    // Predicated region
    $region10: #{tpu_custom_call.1} parent=1 // pred_check
      _
    $region11: #{tpu_custom_call.1} parent=1 // pred_check_branch
      %37 = sbr.rel (0) target = $region13
    $region12: #{tpu_custom_call.1} parent=1 // pred_region
      %39 = vsyncadd [#allocation5], 0
      %s40 = sshll.u32 %s2, 4
      %s41 = int_to_ptr.hbm [resolvable:$true] %s40
      %s42 = sshll.u32 [#allocation6], 4
      %s43 = int_to_ptr.vmem [resolvable:$true] %s42
      %48 = dma.hbm_to_vmem [thread:$0]  %s41, 256, %s43, [#allocation5], 128, 128, 8
    $region13: #{tpu_custom_call.1} parent=1 // pred_fallthru
      _
    // Predicated region
    $region14: #{tpu_custom_call.1} parent=1 // pred_check
      _
    $region15: #{tpu_custom_call.1} parent=1 // pred_check_branch
      %50 = sbr.rel (0) target = $region17
    $region16: #{tpu_custom_call.1} parent=1 // pred_region
      %52 = dma.done [#allocation3], 256
    $region17: #{tpu_custom_call.1} parent=1 // pred_fallthru
      _
    // Predicated region
    $region18: #{tpu_custom_call.1} parent=1 // pred_check
      _
    $region19: #{tpu_custom_call.1} parent=1 // pred_check_branch
      %54 = sbr.rel (0) target = $region21
    $region20: #{tpu_custom_call.1} parent=1 // pred_region
      %56 = dma.done [#allocation5], 256
    $region21: #{tpu_custom_call.1} parent=1 // pred_fallthru
      _
    // Predicated region
    $region22: #{tpu_custom_call.1} parent=1 // pred_check
      _
    $region23: #{tpu_custom_call.1} parent=1 // pred_check_branch
      %58 = sbr.rel (0) target = $region25
    $region24: #{tpu_custom_call.1} parent=1 // pred_region
      %60 = dma.done [#allocation5], 256
    $region25: #{tpu_custom_call.1} parent=1 // pred_fallthru
      _
    %v61 = vld [vmem:[#allocation2] sm:$0xff]
    %v62 = vld [vmem:[#allocation2 + $0x8] sm:$0xff]
    %v63 = vld [vmem:[#allocation4] sm:$0xff]
    %v64 = vld [vmem:[#allocation4 + $0x8] sm:$0xff]
    %v65 = vld [vmem:[#allocation6] sm:$0xff]
    %v66 = vld [vmem:[#allocation6 + $0x8] sm:$0xff]
    %v67 = vmul.f32 %v61, %v63
    %v68 = vmul.f32 %v62, %v64
    %vm69 = vcmask 261120
    %v70 = vsel %vm69, %v67, 0.0
    %71 = vadd.xlane.f32.xlu0 %v70
    %v72 = vpop.xlane.xlu0 %71
    %v73 = vsel %vm69, %v68, 0.0
    %74 = vadd.xlane.f32.xlu0 %v73
    %v75 = vpop.xlane.xlu0 %74
    %v76 = vmul.f32 %v61, %v65
    %v77 = vmul.f32 %v62, %v66
    %v78 = vsel %vm69, %v76, 0.0
    %79 = vadd.xlane.f32.xlu0 %v78
    %v80 = vpop.xlane.xlu0 %79
    %v81 = vsel %vm69, %v77, 0.0
    %82 = vadd.xlane.f32.xlu0 %v81
    %v83 = vpop.xlane.xlu0 %82
    %v84 = vmul.f32 %v61, %v61
    %v85 = vmul.f32 %v62, %v62
    %v86 = vsel %vm69, %v84, 0.0
    %87 = vadd.xlane.f32.xlu0 %v86
    %v88 = vpop.xlane.xlu0 %87
    %v89 = vsel %vm69, %v85, 0.0
    %90 = vadd.xlane.f32.xlu0 %v89
    %v91 = vpop.xlane.xlu0 %90
    %v92 = vmul.f32 %v63, %v63
    %v93 = vmul.f32 %v64, %v64
    %v94 = vsel %vm69, %v92, 0.0
    %95 = vadd.xlane.f32.xlu0 %v94
    %v96 = vpop.xlane.xlu0 %95
    %v97 = vsel %vm69, %v93, 0.0
    %98 = vadd.xlane.f32.xlu0 %v97
    %v99 = vpop.xlane.xlu0 %98
    %v100 = vmul.f32 %v65, %v65
    %v101 = vmul.f32 %v66, %v66
    %v102 = vsel %vm69, %v100, 0.0
    %103 = vadd.xlane.f32.xlu0 %v102
    %v104 = vpop.xlane.xlu0 %103
    %v105 = vsel %vm69, %v101, 0.0
    %106 = vadd.xlane.f32.xlu0 %v105
    %v107 = vpop.xlane.xlu0 %106
    %v108 = vmul.f32 %v88, %v96
    %v109 = vmul.f32 %v91, %v99
    %v110 = vmax.f32 %v108, 1e-16
    %v111 = vmax.f32 %v109, 1e-16
    %v112 = vrsqrt.pop %v110
    %v113 = vmul.f32 %v112, %v110
    %v114 = vmul.f32 %v113, %v112
    %v115 = vmul.f32 0.5, %v114
    %v116 = vsub.f32 1.5, %v115
    %v117 = vmul.f32 %v112, %v116
    %vm118 = vweird.f32 %v110
    %vm119 = vweird.f32 %v112
    %vm120 = vmor %vm118, %vm119
    %v121 = vsel %vm120, %v112, %v117
    %v122 = vrsqrt.pop %v111
    %v123 = vmul.f32 %v122, %v111
    %v124 = vmul.f32 %v123, %v122
    %v125 = vmul.f32 0.5, %v124
    %v126 = vsub.f32 1.5, %v125
    %v127 = vmul.f32 %v122, %v126
    %vm128 = vweird.f32 %v111
    %vm129 = vweird.f32 %v122
    %vm130 = vmor %vm128, %vm129
    %v131 = vsel %vm130, %v122, %v127
    %v132 = vmul.f32 %v72, %v121
    %v133 = vmul.f32 %v75, %v131
    %v134 = vmul.f32 %v88, %v104
    %v135 = vmul.f32 %v91, %v107
    %v136 = vmax.f32 %v134, 1e-16
    %v137 = vmax.f32 %v135, 1e-16
    %v138 = vrsqrt.pop %v136
    %v139 = vmul.f32 %v138, %v136
    %v140 = vmul.f32 %v139, %v138
    %v141 = vmul.f32 0.5, %v140
    %v142 = vsub.f32 1.5, %v141
    %v143 = vmul.f32 %v138, %v142
    %vm144 = vweird.f32 %v136
    %vm145 = vweird.f32 %v138
    %vm146 = vmor %vm144, %vm145
    %v147 = vsel %vm146, %v138, %v143
    %v148 = vrsqrt.pop %v137
    %v149 = vmul.f32 %v148, %v137
    %v150 = vmul.f32 %v149, %v148
    %v151 = vmul.f32 0.5, %v150
    %v152 = vsub.f32 1.5, %v151
    %v153 = vmul.f32 %v148, %v152
    %vm154 = vweird.f32 %v137
    %vm155 = vweird.f32 %v148
    %vm156 = vmor %vm154, %vm155
    %v157 = vsel %vm156, %v148, %v153
    %v158 = vmul.f32 %v80, %v147
    %v159 = vmul.f32 %v83, %v157
    %v162 = vlaneseq
    %v163 = vand.u32 %v162, 127
    %v164 = vperm.slane %v132, %v163
    %v165 = vperm.slane %v133, %v163
    %vm166 = vcmask 1041409
    %v167 = vsel %vm166, %v165, %v164
    %vm169 = vcmask 58368
    %v170 = vsel %vm169, %v167, inf
    %171 = vmin.xlane.f32.xlu0 %v170
    %v172 = vpop.xlane.xlu0 %171
    %v173 = vadd.f32 %v158, 0.3
    %v174 = vadd.f32 %v159, 0.3
    %v176 = vperm.slane %v172, 0
    %v177 = vperm.slane %v172, 1
    %vm180 = vcmp.gt.f32.partialorder %v173, %v176
    %vm181 = vcmp.gt.f32.partialorder %v174, %v177
    %v182 = vsel %vm180, 1, 0
    %v183 = vsel %vm181, 1, 0
    %v184 = vcvt.s32.f32 %v182
    %v185 = vcvt.s32.f32 %v183
    %188 = vset.pattern.permute.xlu0 0
    %189 = vperm.xlu0 %188, %v184
    %v190 = vpop.permute.xlu0 %189
    %191 = vset.pattern.permute.xlu0 0
    %192 = vperm.xlu0 %191, %v185
    %v193 = vpop.permute.xlu0 %192
    %v194 = vperm.slane %v190, %v163
    %v195 = vperm.slane %v193, %v163
    %v196 = vsel %vm166, %v195, %v194
    %v198 = vsel %vm169, %v196, 0.0
    %199 = vadd.xlane.f32.xlu0 %v198
    %v200 = vpop.xlane.xlu0 %199
    %v201 = vsub.f32 %v132, 0.5
    %v202 = vsub.f32 %v133, 0.5
    %v203 = vmul.f32 %v201, -2.0
    %v204 = vmul.f32 %v202, -2.0
    %v205 = vmul.f32 %v203, 1.442695
    %v206 = vpow.pop %v205
    %v207 = vmul.f32 %v204, 1.442695
    %v208 = vpow.pop %v207
    %v211 = vperm.slane %v206, %v163
    %v212 = vperm.slane %v208, %v163
    %v213 = vsel %vm166, %v212, %v211
    %v215 = vsel %vm169, %v213, 0.0
    %216 = vadd.xlane.f32.xlu0 %v215
    %v217 = vpop.xlane.xlu0 %216
    %v218 = vadd.f32 %v217, 1.0
    %v219 = vlog2.pop %v218
    %v220 = vmul.f32 %v219, 0.6931472
    %v221 = vmul.f32 %v220, 0.5
    %v222 = vsub.f32 %v158, 0.5
    %v223 = vsub.f32 %v159, 0.5
    %v224 = vmul.f32 %v222, 40.0
    %v225 = vmul.f32 %v223, 40.0
    %v226 = vmul.f32 %v224, 1.442695
    %v227 = vpow.pop %v226
    %v228 = vmul.f32 %v225, 1.442695
    %v229 = vpow.pop %v228
    %v230 = vsel %vm180, %v227, 0.0
    %v231 = vsel %vm181, %v229, 0.0
    %234 = vset.pattern.permute.xlu0 0
    %235 = vperm.xlu0 %234, %v230
    %v236 = vpop.permute.xlu0 %235
    %237 = vset.pattern.permute.xlu0 0
    %238 = vperm.xlu0 %237, %v231
    %v239 = vpop.permute.xlu0 %238
    %v240 = vperm.slane %v236, %v163
    %v241 = vperm.slane %v239, %v163
    %v242 = vsel %vm166, %v241, %v240
    %v244 = vsel %vm169, %v242, 0.0
    %245 = vadd.xlane.f32.xlu0 %v244
    %v246 = vpop.xlane.xlu0 %245
    %v247 = vadd.f32 %v246, 1.0
    %v248 = vlog2.pop %v247
    %v249 = vmul.f32 %v248, 0.6931472
    %v250 = vmul.f32 %v249, 0.025
    %s251 = smul.u32 0, 2
    %v252 = vlaneseq
    %v253 = vshrl.u32 %v252, 7
    %v254 = vstv %s251
    %v255 = vadd.s32 %v254, %v253
    %vm256 = vcmp.gt.f32.partialorder %v200, 0.0
    %vm257 = vcmp.lt.s32.totalorder %v255, 2
    %vm258 = vmand %vm256, %vm257
    %v259 = vadd.f32 %v221, %v250
    %v260 = vsel %vm258, %v259, 0.0
    %vm261 = vcmask 1024
    %262 = vst.msk [vmem:[%s3] sm:$0x3] %vm261, %v260
    // Predicated region
    $region26: #{tpu_custom_call.1} parent=1 // pred_check
      _
    $region27: #{tpu_custom_call.1} parent=1 // pred_check_branch
      %264 = sbr.rel (0) target = $region29
    $region28: #{tpu_custom_call.1} parent=1 // pred_region
      _
    $region29: #{tpu_custom_call.1} parent=1 // pred_fallthru
      _
    // Predicated region
    $region30: #{tpu_custom_call.1} parent=1 // pred_check
      _
    $region31: #{tpu_custom_call.1} parent=1 // pred_check_branch
      %266 = sbr.rel (0) target = $region33
    $region32: #{tpu_custom_call.1} parent=1 // pred_region
      _
    $region33: #{tpu_custom_call.1} parent=1 // pred_fallthru
      _
    %267 = vsyncpa [#allocation3], 1
    %268 = vsyncpa [#allocation5], 1

</llo_original>
